<compile_context>
chip_gen: v6e
topology: v6e:2x2x1
jax: 0.10.0
libtpu: 0.0.40
codegen_flags: <defaults>
</compile_context>

<pallas_src>
import numpy as np
import jax
import jax.numpy as jnp
from jax import lax
from jax.experimental import pallas as pl
from jax.experimental.pallas import tpu as pltpu

# Small, deterministic config consistent with the module's __init__
N_VOCAB      = 50
EMBED        = 32
SEQ_LEN      = 16
NUM_FILTERS  = 8
FILTER_SIZES = (2, 3, 4)
NUM_CLASSES  = 4
BATCH        = 2

K_MAX    = max(FILTER_SIZES)
TOTAL_F  = NUM_FILTERS * len(FILTER_SIZES)   # 24
BS       = BATCH * SEQ_LEN                   # 32 (batch folded into the matmul M dim)
SENTINEL = K_MAX * N_VOCAB                   # 200 -- never matches a one-hot lane


def textcnn_kernel(key_ref, tw_ref, b_ref, fcw_ref, mask_ref, out_ref):
    # key_ref:  (BS, K_MAX) int32   im2col keys (id + j*V, SENTINEL past the end)
    # tw_ref:   (K_MAX*V, 3F) f32   embedding folded into zero-padded conv kernels
    # b_ref:    (2, 3F)             row 0 = conv bias, row 1 = [fc bias | 0]
    # fcw_ref:  (3F, C)             mask_ref: (BS, 3F) 0/1 f32      out_ref: (B, C)

    # 1) Shifted one-hot lhs for the im2col matmul: lhs[m, j*V + v] = 1 iff
    #    key[m, j] == j*V + v.  K_MAX vreg compares; no gathers, no sublane shifts.
    colc = lax.broadcasted_iota(jnp.int32, (BS, K_MAX * N_VOCAB), 1)          # (32, 200)
    hit = key_ref[:, 0:1] == colc
    for j in range(1, K_MAX):
        hit = hit | (key_ref[:, j:j + 1] == colc)
    lhs = hit.astype(jnp.float32)

    # 2) ONE MXU pass fuses the embedding lookup and all three conv branches
    #    (tw rows are zero for j >= filter_size, keeping each branch at its width).
    conv = jnp.dot(lhs, tw_ref[...], preferred_element_type=jnp.float32)      # (32, 24)
    act = jnp.maximum(conv + b_ref[0:1, :], 0.0)                              # bias + ReLU

    # 3) Masked global max-pool: one reduction over the (B, S, 3F) view.  Rows past
    #    the valid conv length (incl. cross-batch bleed) are zeroed by the 0/1 mask,
    #    which is exact because ReLU precedes the pool (valid rows are >= 0).
    masked = act * mask_ref[...]
    feat = jnp.max(masked.reshape(BATCH, SEQ_LEN, TOTAL_F), axis=1)           # (B, 3F)

    # 4) Fused fc (dropout is identity in eval mode).
    #    NOTE: the (B, C) = (2, 4) store is a masked partial vst; padding the output
    #    to lane width was reviewed as a negligible win at this size, so skipped.
    out_ref[...] = (jnp.dot(feat, fcw_ref[...], preferred_element_type=jnp.float32)
                    + b_ref[1:2, :NUM_CLASSES])


def init_params(key):
    k_emb, k2, k3, k4, kb2, kb3, kb4, kfw, kfb = jax.random.split(key, 9)
    emb_table = jax.random.normal(k_emb, (N_VOCAB, EMBED), jnp.float32) * 0.1
    emb_table = emb_table.at[N_VOCAB - 1].set(0.0)   # padding_idx = n_vocab - 1
    conv_ws, conv_bs = [], []
    for k_sz, kw, kb in zip(FILTER_SIZES, (k2, k3, k4), (kb2, kb3, kb4)):
        # PyTorch Conv2d weight shape (F, 1, k, E) -> kernel layout (k, E, F)
        w = jax.random.normal(kw, (NUM_FILTERS, 1, k_sz, EMBED), jnp.float32) * 0.1
        conv_ws.append(jnp.transpose(w[:, 0], (1, 2, 0)))
        conv_bs.append(jax.random.normal(kb, (1, NUM_FILTERS), jnp.float32) * 0.1)
    # PyTorch Linear weight (C, 3F); we carry its transpose (3F, C)
    fc_w = jax.random.normal(kfw, (NUM_CLASSES, TOTAL_F), jnp.float32) * 0.1
    fc_b = jax.random.normal(kfb, (1, NUM_CLASSES), jnp.float32) * 0.1
    return emb_table, tuple(conv_ws), tuple(conv_bs), fc_w.T, fc_b


def pack_params(params):
    """Fold embedding into conv weights and pack the 9 tensors into 4 kernel inputs."""
    emb_table, conv_ws, conv_bs, fc_w_t, fc_b = params
    # Zero-pad each conv kernel to K_MAX taps and place its filters in its lane block.
    w_packed = jnp.zeros((K_MAX, EMBED, TOTAL_F), jnp.float32)
    for idx, (ksz, w) in enumerate(zip(FILTER_SIZES, conv_ws)):
        w_packed = w_packed.at[:ksz, :, idx * NUM_FILTERS:(idx + 1) * NUM_FILTERS].set(w)
    # Fold the embedding table into the conv weights: tw[j*V + v] = emb_table[v] @ w[j].
    tw = jnp.einsum('ve,kef->kvf', emb_table, w_packed).reshape(K_MAX * N_VOCAB, TOTAL_F)
    # Biases: row 0 = conv biases (3F lanes), row 1 = fc bias padded to 3F lanes.
    b_conv = jnp.concatenate(list(conv_bs), axis=1)                            # (1, 3F)
    b_fc = jnp.concatenate(
        [fc_b, jnp.zeros((1, TOTAL_F - NUM_CLASSES), jnp.float32)], axis=1)    # (1, 3F)
    b_packed = jnp.concatenate([b_conv, b_fc], axis=0)                         # (2, 3F)
    # 0/1 validity mask for the max-pool: row r of a batch is valid for the
    # filter-size-k branch iff r < SEQ_LEN - k + 1.  Host-side numpy constant.
    valid_np = np.zeros((BS, TOTAL_F), np.float32)
    for b in range(BATCH):
        for idx, ksz in enumerate(FILTER_SIZES):
            valid_np[b * SEQ_LEN: b * SEQ_LEN + (SEQ_LEN - ksz + 1),
                     idx * NUM_FILTERS:(idx + 1) * NUM_FILTERS] = 1.0
    return tw, b_packed, fc_w_t, jnp.asarray(valid_np)


@jax.jit
def textcnn_forward(ids, tw, b_packed, fc_w_t, valid_mask):
    # im2col key table (tiny, plain XLA ops under the same jit):
    # key[m, j] = ids_flat[m + j] + j*V for in-range m+j, else SENTINEL.
    ids_flat = ids.reshape(-1).astype(jnp.int32)                               # (BS,)
    ids_pad = jnp.concatenate([ids_flat, jnp.full((K_MAX - 1,), -1, jnp.int32)])
    sh = jnp.stack([ids_pad[j:j + BS] for j in range(K_MAX)], axis=1)          # (BS, K_MAX)
    offs = jnp.arange(K_MAX, dtype=jnp.int32)[None, :] * N_VOCAB
    key = jnp.where(sh >= 0, sh + offs, SENTINEL).astype(jnp.int32)

    # Single invocation, no grid: every operand is KB-scale and lives fully in VMEM.
    # TODO(synk): if BATCH grows, add a batch grid marked "parallel" so v7x's two
    #   TensorCores each take half the batch (pure overhead at B=2).
    # TODO(synk): at realistic vocab sizes the folded (K_MAX*V, 3F) table no longer
    #   fits VMEM (v7x: 64 MiB) -- switch to memory_space=pl.ANY + scalar-prefetch
    #   row gather of the embedding table instead of the one-hot matmul.
    vmem = lambda: pl.BlockSpec(memory_space=pltpu.MemorySpace.VMEM)
    return pl.pallas_call(
        textcnn_kernel,
        out_shape=jax.ShapeDtypeStruct((BATCH, NUM_CLASSES), jnp.float32),
        in_specs=[vmem() for _ in range(5)],
        out_specs=vmem(),
    )(key, tw, b_packed, fc_w_t, valid_mask)


def ref_forward(ids, params):
    """Pure-JAX reference mirroring the PyTorch forward."""
    emb_table, conv_ws, conv_bs, fc_w_t, fc_b = params
    emb = jnp.take(emb_table, ids, axis=0)            # (B, S, E)
    feats = []
    for w, b in zip(conv_ws, conv_bs):
        k = w.shape[0]
        L = SEQ_LEN - k + 1
        conv = jnp.zeros((BATCH, L, NUM_FILTERS), jnp.float32)
        for j in range(k):
            conv += jnp.einsum('bse,ef->bsf', emb[:, j:j + L, :], w[j])
        conv = jnp.maximum(conv + b, 0.0)
        feats.append(jnp.max(conv, axis=1))
    feat = jnp.concatenate(feats, axis=1)             # (B, 3F)
    return feat @ fc_w_t + fc_b                       # (B, C)


if __name__ == "__main__":
    key = jax.random.PRNGKey(0)
    kp, kx = jax.random.split(key)
    params = init_params(kp)
    # x[0] in the PyTorch forward: integer token ids of shape (B, S)
    ids = jax.random.randint(kx, (BATCH, SEQ_LEN), 0, N_VOCAB, dtype=jnp.int32)

    tw, b_packed, fc_w_t, valid_mask = pack_params(params)
    out = textcnn_forward(ids, tw, b_packed, fc_w_t, valid_mask)
    out = jax.block_until_ready(out)

    ref = ref_forward(ids, params)
    assert out.shape == (BATCH, NUM_CLASSES), out.shape
    assert jnp.allclose(out, ref, atol=1e-4, rtol=1e-4), (out, ref)
    print("KERNEL_OK")
</pallas_src>

<mosaic_0001>
module attributes {stable_mosaic.version = 11 : i64} {
  func.func @textcnn_kernel(%arg0: memref<32x4xi32, #tpu.memory_space<vmem>>, %arg1: memref<200x24xf32, #tpu.memory_space<vmem>>, %arg2: memref<2x24xf32, #tpu.memory_space<vmem>>, %arg3: memref<24x4xf32, #tpu.memory_space<vmem>>, %arg4: memref<32x24xf32, #tpu.memory_space<vmem>>, %arg5: memref<2x4xf32, #tpu.memory_space<vmem>>) attributes {dimension_semantics = [], scalar_prefetch = 0 : i64, scratch_operands = 0 : i64, tpu.core_type = #tpu.core_type<tc>} {
    %0 = tpu.iota {dimensions = array<i32: 1>} : vector<32x200xi32>
    %c0 = arith.constant 0 : index
    %c0_0 = arith.constant 0 : index
    %1 = vector.load %arg0[%c0, %c0_0] : memref<32x4xi32, #tpu.memory_space<vmem>>, vector<32x1xi32>
    %2 = vector.broadcast %1 : vector<32x1xi32> to vector<32x200xi32>
    %3 = arith.cmpi eq, %2, %0 : vector<32x200xi32>
    %c0_1 = arith.constant 0 : index
    %c1 = arith.constant 1 : index
    %4 = vector.load %arg0[%c0_1, %c1] : memref<32x4xi32, #tpu.memory_space<vmem>>, vector<32x1xi32>
    %5 = vector.broadcast %4 : vector<32x1xi32> to vector<32x200xi32>
    %6 = arith.cmpi eq, %5, %0 : vector<32x200xi32>
    %7 = arith.ori %3, %6 : vector<32x200xi1>
    %c0_2 = arith.constant 0 : index
    %c2 = arith.constant 2 : index
    %8 = vector.load %arg0[%c0_2, %c2] : memref<32x4xi32, #tpu.memory_space<vmem>>, vector<32x1xi32>
    %9 = vector.broadcast %8 : vector<32x1xi32> to vector<32x200xi32>
    %10 = arith.cmpi eq, %9, %0 : vector<32x200xi32>
    %11 = arith.ori %7, %10 : vector<32x200xi1>
    %c0_3 = arith.constant 0 : index
    %c3 = arith.constant 3 : index
    %12 = vector.load %arg0[%c0_3, %c3] : memref<32x4xi32, #tpu.memory_space<vmem>>, vector<32x1xi32>
    %13 = vector.broadcast %12 : vector<32x1xi32> to vector<32x200xi32>
    %14 = arith.cmpi eq, %13, %0 : vector<32x200xi32>
    %15 = arith.ori %11, %14 : vector<32x200xi1>
    %16 = arith.extui %15 : vector<32x200xi1> to vector<32x200xi32>
    %17 = arith.sitofp %16 : vector<32x200xi32> to vector<32x200xf32>
    %c0_4 = arith.constant 0 : index
    %c0_5 = arith.constant 0 : index
    %18 = vector.load %arg1[%c0_4, %c0_5] : memref<200x24xf32, #tpu.memory_space<vmem>>, vector<200x24xf32>
    %cst = arith.constant dense<0.000000e+00> : vector<32x24xf32>
    %19 = tpu.matmul %17, %18, %cst {dimension_numbers = #tpu.dot_dimension_numbers<[1], [0], [0], [1], [0, 0, 1, 1], [], []>} : vector<32x200xf32>, vector<200x24xf32>, vector<32x24xf32> -> vector<32x24xf32>
    %c0_6 = arith.constant 0 : index
    %c0_7 = arith.constant 0 : index
    %20 = vector.load %arg2[%c0_6, %c0_7] : memref<2x24xf32, #tpu.memory_space<vmem>>, vector<1x24xf32>
    %21 = vector.broadcast %20 : vector<1x24xf32> to vector<32x24xf32>
    %22 = arith.addf %19, %21 : vector<32x24xf32>
    %cst_8 = arith.constant 0.000000e+00 : f32
    %23 = vector.broadcast %cst_8 : f32 to vector<32x24xf32>
    %24 = arith.maximumf %22, %23 : vector<32x24xf32>
    %c0_9 = arith.constant 0 : index
    %c0_10 = arith.constant 0 : index
    %25 = vector.load %arg4[%c0_9, %c0_10] : memref<32x24xf32, #tpu.memory_space<vmem>>, vector<32x24xf32>
    %26 = arith.mulf %24, %25 : vector<32x24xf32>
    %27 = vector.shape_cast %26 : vector<32x24xf32> to vector<2x16x24xf32>
    %cst_11 = arith.constant dense<0xFF800000> : vector<2x24xf32>
    %28 = vector.multi_reduction <maximumf>, %27, %cst_11 [1] : vector<2x16x24xf32> to vector<2x24xf32>
    %c0_12 = arith.constant 0 : index
    %c0_13 = arith.constant 0 : index
    %29 = vector.load %arg3[%c0_12, %c0_13] : memref<24x4xf32, #tpu.memory_space<vmem>>, vector<24x4xf32>
    %cst_14 = arith.constant dense<0.000000e+00> : vector<2x4xf32>
    %30 = tpu.matmul %28, %29, %cst_14 {dimension_numbers = #tpu.dot_dimension_numbers<[1], [0], [0], [1], [0, 0, 1, 1], [], []>} : vector<2x24xf32>, vector<24x4xf32>, vector<2x4xf32> -> vector<2x4xf32>
    %c1_15 = arith.constant 1 : index
    %c0_16 = arith.constant 0 : index
    %31 = vector.load %arg2[%c1_15, %c0_16] : memref<2x24xf32, #tpu.memory_space<vmem>>, vector<1x4xf32>
    %32 = vector.broadcast %31 : vector<1x4xf32> to vector<2x4xf32>
    %33 = arith.addf %30, %32 : vector<2x4xf32>
    %c0_17 = arith.constant 0 : index
    %c0_18 = arith.constant 0 : index
    %34 = vector.load %arg5[%c0_17, %c0_18] : memref<2x4xf32, #tpu.memory_space<vmem>>, vector<2x4xf32>
    tpu.vector_store %arg5[%c0_17, %c0_18], %33 {strides = array<i32>} : memref<2x4xf32, #tpu.memory_space<vmem>>, vector<2x4xf32>,
    return
  }
}

</mosaic_0001>

<llo_original>
// kernel: textcnn_forward.1
$region0: #{textcnn_forward.1}
  #allocation0 [shape = 'u32[]', space=smem, size = 0x4, offset = 0x4, fixed_abs, tag = 'smem constant byte address 0x4 - core index']
  #allocation1 [shape = 'u32[144,128]{1,0:T(1,128)}', space=vmem, size = 0x12000, scoped, tag = 'internal scratch']
  %s0 = inlined_call_operand.vmem [shape: s32[32,4], index: 0, kind: input, shape index: {}]
  %s1 = inlined_call_operand.vmem [shape: f32[200,24], index: 1, kind: input, shape index: {}]
  %s2 = inlined_call_operand.vmem [shape: f32[2,24], index: 2, kind: input, shape index: {}]
  %s3 = inlined_call_operand.vmem [shape: f32[24,4], index: 3, kind: input, shape index: {}]
  %s4 = inlined_call_operand.vmem [shape: f32[32,24], index: 4, kind: input, shape index: {}]
  %s5 = inlined_call_operand.hbm [shape: f32[2,4], index: 5, kind: output, shape index: {}]
  %s6 = sld [smem:[#allocation0]]
  $region30: #{textcnn_forward.1} parent=0
    _
  %s8 = ssub.s32 1, %s6
  %s9 = scalar_select 0, %s8, %s6
  $region1: #{textcnn_forward.1} parent=0
    #allocation2 [shape = 'u8[1024]{0}', space=vmem, size = 0x400, scoped, tag = 'output window, operand 0, single buffered']
    #allocation3 [shape = 's32[1]{0}', space=sflag, size = 0x4, scoped, tag = 'scoped memory for textcnn_forward.1']
    %10 = vsyncpa [#allocation3], 0
    // Predicated region
    $region2: #{textcnn_forward.1} parent=1 // pred_check
      _
    $region3: #{textcnn_forward.1} parent=1 // pred_check_branch
      %12 = sbr.rel (0) target = $region5
    $region4: #{textcnn_forward.1} parent=1 // pred_region
      _
    $region5: #{textcnn_forward.1} parent=1 // pred_fallthru
      _
    // Predicated region
    $region6: #{textcnn_forward.1} parent=1 // pred_check
      _
    $region7: #{textcnn_forward.1} parent=1 // pred_check_branch
      %14 = sbr.rel (0) target = $region9
    $region8: #{textcnn_forward.1} parent=1 // pred_region
      _
    $region9: #{textcnn_forward.1} parent=1 // pred_fallthru
      _
    // Predicated region
    $region10: #{textcnn_forward.1} parent=1 // pred_check
      _
    $region11: #{textcnn_forward.1} parent=1 // pred_check_branch
      %16 = sbr.rel (0) target = $region13
    $region12: #{textcnn_forward.1} parent=1 // pred_region
      _
    $region13: #{textcnn_forward.1} parent=1 // pred_fallthru
      _
    // Predicated region
    $region14: #{textcnn_forward.1} parent=1 // pred_check
      _
    $region15: #{textcnn_forward.1} parent=1 // pred_check_branch
      %18 = sbr.rel (0) target = $region17
    $region16: #{textcnn_forward.1} parent=1 // pred_region
      _
    $region17: #{textcnn_forward.1} parent=1 // pred_fallthru
      _
    // Predicated region
    $region18: #{textcnn_forward.1} parent=1 // pred_check
      _
    $region19: #{textcnn_forward.1} parent=1 // pred_check_branch
      %20 = sbr.rel (0) target = $region21
    $region20: #{textcnn_forward.1} parent=1 // pred_region
      _
    $region21: #{textcnn_forward.1} parent=1 // pred_fallthru
      _
    %v21 = vlaneseq
    %v22 = vand.u32 %v21, 127
    %v23 = vadd.s32 %v22, 128
    %v24 = vld [vmem:[%s0] sm:$0xff]
    %v25 = vld [vmem:[%s0 + $0x8] sm:$0xff]
    %v26 = vld [vmem:[%s0 + $0x10] sm:$0xff]
    %v27 = vld [vmem:[%s0 + $0x18] sm:$0xff]
    %28 = vset.pattern.permute.xlu0 0
    %29 = vperm.xlu0 %28, %v24
    %v30 = vpop.permute.xlu0 %29
    %31 = vset.pattern.permute.xlu0 0
    %32 = vperm.xlu0 %31, %v25
    %v33 = vpop.permute.xlu0 %32
    %34 = vset.pattern.permute.xlu0 0
    %35 = vperm.xlu0 %34, %v26
    %v36 = vpop.permute.xlu0 %35
    %37 = vset.pattern.permute.xlu0 0
    %38 = vperm.xlu0 %37, %v27
    %v39 = vpop.permute.xlu0 %38
    %vm40 = vcmp.eq.s32.totalorder %v30, %v22
    %vm41 = vcmp.eq.s32.totalorder %v30, %v23
    %vm42 = vcmp.eq.s32.totalorder %v33, %v22
    %vm43 = vcmp.eq.s32.totalorder %v33, %v23
    %vm44 = vcmp.eq.s32.totalorder %v36, %v22
    %vm45 = vcmp.eq.s32.totalorder %v36, %v23
    %vm46 = vcmp.eq.s32.totalorder %v39, %v22
    %vm47 = vcmp.eq.s32.totalorder %v39, %v23
    %48 = vset.pattern.permute.xlu0 1
    %49 = vperm.xlu0 %48, %v24
    %v50 = vpop.permute.xlu0 %49
    %51 = vset.pattern.permute.xlu0 1
    %52 = vperm.xlu0 %51, %v25
    %v53 = vpop.permute.xlu0 %52
    %54 = vset.pattern.permute.xlu0 1
    %55 = vperm.xlu0 %54, %v26
    %v56 = vpop.permute.xlu0 %55
    %57 = vset.pattern.permute.xlu0 1
    %58 = vperm.xlu0 %57, %v27
    %v59 = vpop.permute.xlu0 %58
    %vm60 = vcmp.eq.s32.totalorder %v50, %v22
    %vm61 = vcmp.eq.s32.totalorder %v50, %v23
    %vm62 = vcmp.eq.s32.totalorder %v53, %v22
    %vm63 = vcmp.eq.s32.totalorder %v53, %v23
    %vm64 = vcmp.eq.s32.totalorder %v56, %v22
    %vm65 = vcmp.eq.s32.totalorder %v56, %v23
    %vm66 = vcmp.eq.s32.totalorder %v59, %v22
    %vm67 = vcmp.eq.s32.totalorder %v59, %v23
    %vm68 = vmor %vm40, %vm60
    %vm69 = vmor %vm41, %vm61
    %vm70 = vmor %vm42, %vm62
    %vm71 = vmor %vm43, %vm63
    %vm72 = vmor %vm44, %vm64
    %vm73 = vmor %vm45, %vm65
    %vm74 = vmor %vm46, %vm66
    %vm75 = vmor %vm47, %vm67
    %76 = vset.pattern.permute.xlu0 2
    %77 = vperm.xlu0 %76, %v24
    %v78 = vpop.permute.xlu0 %77
    %79 = vset.pattern.permute.xlu0 2
    %80 = vperm.xlu0 %79, %v25
    %v81 = vpop.permute.xlu0 %80
    %82 = vset.pattern.permute.xlu0 2
    %83 = vperm.xlu0 %82, %v26
    %v84 = vpop.permute.xlu0 %83
    %85 = vset.pattern.permute.xlu0 2
    %86 = vperm.xlu0 %85, %v27
    %v87 = vpop.permute.xlu0 %86
    %vm88 = vcmp.eq.s32.totalorder %v78, %v22
    %vm89 = vcmp.eq.s32.totalorder %v78, %v23
    %vm90 = vcmp.eq.s32.totalorder %v81, %v22
    %vm91 = vcmp.eq.s32.totalorder %v81, %v23
    %vm92 = vcmp.eq.s32.totalorder %v84, %v22
    %vm93 = vcmp.eq.s32.totalorder %v84, %v23
    %vm94 = vcmp.eq.s32.totalorder %v87, %v22
    %vm95 = vcmp.eq.s32.totalorder %v87, %v23
    %vm96 = vmor %vm68, %vm88
    %vm97 = vmor %vm69, %vm89
    %vm98 = vmor %vm70, %vm90
    %vm99 = vmor %vm71, %vm91
    %vm100 = vmor %vm72, %vm92
    %vm101 = vmor %vm73, %vm93
    %vm102 = vmor %vm74, %vm94
    %vm103 = vmor %vm75, %vm95
    %104 = vset.pattern.permute.xlu0 3
    %105 = vperm.xlu0 %104, %v24
    %v106 = vpop.permute.xlu0 %105
    %107 = vset.pattern.permute.xlu0 3
    %108 = vperm.xlu0 %107, %v25
    %v109 = vpop.permute.xlu0 %108
    %110 = vset.pattern.permute.xlu0 3
    %111 = vperm.xlu0 %110, %v26
    %v112 = vpop.permute.xlu0 %111
    %113 = vset.pattern.permute.xlu0 3
    %114 = vperm.xlu0 %113, %v27
    %v115 = vpop.permute.xlu0 %114
    %vm116 = vcmp.eq.s32.totalorder %v106, %v22
    %vm117 = vcmp.eq.s32.totalorder %v106, %v23
    %vm118 = vcmp.eq.s32.totalorder %v109, %v22
    %vm119 = vcmp.eq.s32.totalorder %v109, %v23
    %vm120 = vcmp.eq.s32.totalorder %v112, %v22
    %vm121 = vcmp.eq.s32.totalorder %v112, %v23
    %vm122 = vcmp.eq.s32.totalorder %v115, %v22
    %vm123 = vcmp.eq.s32.totalorder %v115, %v23
    %vm124 = vmor %vm96, %vm116
    %vm125 = vmor %vm97, %vm117
    %vm126 = vmor %vm98, %vm118
    %vm127 = vmor %vm99, %vm119
    %vm128 = vmor %vm100, %vm120
    %vm129 = vmor %vm101, %vm121
    %vm130 = vmor %vm102, %vm122
    %vm131 = vmor %vm103, %vm123
    %v132 = vsel %vm124, 1, 0
    %v133 = vsel %vm125, 1, 0
    %v134 = vsel %vm126, 1, 0
    %v135 = vsel %vm127, 1, 0
    %v136 = vsel %vm128, 1, 0
    %v137 = vsel %vm129, 1, 0
    %v138 = vsel %vm130, 1, 0
    %v139 = vsel %vm131, 1, 0
    %v140 = vcvt.s32.f32 %v132
    %v141 = vcvt.s32.f32 %v133
    %v142 = vcvt.s32.f32 %v134
    %v143 = vcvt.s32.f32 %v135
    %v144 = vcvt.s32.f32 %v136
    %v145 = vcvt.s32.f32 %v137
    %v146 = vcvt.s32.f32 %v138
    %v147 = vcvt.s32.f32 %v139
    %v148 = vld [vmem:[%s1] sm:$0xff]
    %v149 = vld [vmem:[%s1 + $0x8] sm:$0xff]
    %v150 = vld [vmem:[%s1 + $0x10] sm:$0xff]
    %v151 = vld [vmem:[%s1 + $0x18] sm:$0xff]
    %v152 = vld [vmem:[%s1 + $0x20] sm:$0xff]
    %v153 = vld [vmem:[%s1 + $0x28] sm:$0xff]
    %v154 = vld [vmem:[%s1 + $0x30] sm:$0xff]
    %v155 = vld [vmem:[%s1 + $0x38] sm:$0xff]
    %v156 = vld [vmem:[%s1 + $0x40] sm:$0xff]
    %v157 = vld [vmem:[%s1 + $0x48] sm:$0xff]
    %v158 = vld [vmem:[%s1 + $0x50] sm:$0xff]
    %v159 = vld [vmem:[%s1 + $0x58] sm:$0xff]
    %v160 = vld [vmem:[%s1 + $0x60] sm:$0xff]
    %v161 = vld [vmem:[%s1 + $0x68] sm:$0xff]
    %v162 = vld [vmem:[%s1 + $0x70] sm:$0xff]
    %v163 = vld [vmem:[%s1 + $0x78] sm:$0xff]
    %v164 = vld [vmem:[%s1 + $0x80] sm:$0xff]
    %v165 = vld [vmem:[%s1 + $0x88] sm:$0xff]
    %v166 = vld [vmem:[%s1 + $0x90] sm:$0xff]
    %v167 = vld [vmem:[%s1 + $0x98] sm:$0xff]
    %v168 = vld [vmem:[%s1 + $0xa0] sm:$0xff]
    %v169 = vld [vmem:[%s1 + $0xa8] sm:$0xff]
    %v170 = vld [vmem:[%s1 + $0xb0] sm:$0xff]
    %v171 = vld [vmem:[%s1 + $0xb8] sm:$0xff]
    %v172 = vld [vmem:[%s1 + $0xc0] sm:$0xff]
    %v173 = vld [vmem:[%s2] sm:$0x1]
    %v174 = vlaneseq
    %v175 = vshrl.u32 %v174, 7
    %v176 = vsub.s32 0, %v175
    %v177 = vrot.slane %v173, %v176
    %vm178 = vcmask 588800
    %v180 = vsel %vm178, %v141, 0
    %v183 = vsel %vm178, %v143, 0
    %v186 = vsel %vm178, %v145, 0
    %v189 = vsel %vm178, %v147, 0
    %191 = vmatprep.subr.mxu0 0.0
    %192 = vmatpush1.msra.mxu0 %v163
    %193 = vmatprep.subr.mxu0 0.0
    %194 = vmatpush1.msra.mxu0 %v162
    %195 = vmatprep.subr.mxu0 0.0
    %196 = vmatpush1.msra.mxu0 %v161
    %197 = vmatprep.subr.mxu0 0.0
    %198 = vmatpush1.msra.mxu0 %v160
    %199 = vmatprep.subr.mxu0 0.0
    %200 = vmatpush1.msra.mxu0 %v159
    %201 = vmatprep.subr.mxu0 0.0
    %202 = vmatpush1.msra.mxu0 %v158
    %203 = vmatprep.subr.mxu0 0.0
    %204 = vmatpush1.msra.mxu0 %v157
    %205 = vmatprep.subr.mxu0 0.0
    %206 = vmatpush1.msra.mxu0 %v156
    %207 = vmatprep.subr.mxu0 0.0
    %208 = vmatpush1.msra.mxu0 %v155
    %209 = vmatprep.subr.mxu0 0.0
    %210 = vmatpush1.msra.mxu0 %v154
    %211 = vmatprep.subr.mxu0 0.0
    %212 = vmatpush1.msra.mxu0 %v153
    %213 = vmatprep.subr.mxu0 0.0
    %214 = vmatpush1.msra.mxu0 %v152
    %215 = vmatprep.subr.mxu0 0.0
    %216 = vmatpush1.msra.mxu0 %v151
    %217 = vmatprep.subr.mxu0 0.0
    %218 = vmatpush1.msra.mxu0 %v150
    %219 = vmatprep.subr.mxu0 0.0
    %220 = vmatpush1.msra.mxu0 %v149
    %221 = vmatprep.subr.mxu0 0.0
    %222 = vmatpush1.msra.mxu0 %v148
    %223 = vmatprep.subr.mxu0 0.0
    %224 = vmatpush2.msra.mxu0 0.0
    %225 = vmatprep.subr.mxu0 0.0
    %226 = vmatpush2.msra.mxu0 0.0
    %227 = vmatprep.subr.mxu0 0.0
    %228 = vmatpush2.msra.mxu0 0.0
    %229 = vmatprep.subr.mxu0 0.0
    %230 = vmatpush2.msra.mxu0 0.0
    %231 = vmatprep.subr.mxu0 0.0
    %232 = vmatpush2.msra.mxu0 0.0
    %233 = vmatprep.subr.mxu0 0.0
    %234 = vmatpush2.msra.mxu0 0.0
    %235 = vmatprep.subr.mxu0 0.0
    %236 = vmatpush2.msra.mxu0 0.0
    %237 = vmatprep.subr.mxu0 0.0
    %238 = vmatpush2.msra.mxu0 %v172
    %239 = vmatprep.subr.mxu0 0.0
    %240 = vmatpush2.msra.mxu0 %v171
    %241 = vmatprep.subr.mxu0 0.0
    %242 = vmatpush2.msra.mxu0 %v170
    %243 = vmatprep.subr.mxu0 0.0
    %244 = vmatpush2.msra.mxu0 %v169
    %245 = vmatprep.subr.mxu0 0.0
    %246 = vmatpush2.msra.mxu0 %v168
    %247 = vmatprep.subr.mxu0 0.0
    %248 = vmatpush2.msra.mxu0 %v167
    %249 = vmatprep.subr.mxu0 0.0
    %250 = vmatpush2.msra.mxu0 %v166
    %251 = vmatprep.subr.mxu0 0.0
    %252 = vmatpush2.msra.mxu0 %v165
    %253 = vmatprep.subr.mxu0 0.0
    %254 = vmatpush2.msra.mxu0 %v164
    %255 = vmatprep.mubr.f32.mxu0 %v180
    %256 = vmatmul.mubr.f32.gmra.mxu0 %v140
    %v257 = vpop.f32.mrf.mxu0
    %v258 = vadd.f32 %v177, %v257
    %v259 = vpop.f32.mrf.mxu0
    %260 = vmatprep.mubr.f32.mxu0 %v183
    %261 = vmatmul.mubr.f32.gmra.mxu0 %v142
    %v262 = vpop.f32.mrf.mxu0
    %v263 = vadd.f32 %v177, %v262
    %v264 = vpop.f32.mrf.mxu0
    %265 = vmatprep.mubr.f32.mxu0 %v186
    %266 = vmatmul.mubr.f32.gmra.mxu0 %v144
    %v267 = vpop.f32.mrf.mxu0
    %v268 = vadd.f32 %v177, %v267
    %v269 = vpop.f32.mrf.mxu0
    %270 = vmatprep.mubr.f32.mxu0 %v189
    %271 = vmatmul.mubr.f32.gmra.mxu0 %v146
    %v272 = vpop.f32.mrf.mxu0
    %v273 = vadd.f32 %v177, %v272
    %v274 = vpop.f32.mrf.mxu0
    %275 = vdwg.mxu0
    %v276 = vmax.f32 %v258, 0.0
    %v277 = vmax.f32 %v263, 0.0
    %v278 = vmax.f32 %v268, 0.0
    %v279 = vmax.f32 %v273, 0.0
    %v280 = vld [vmem:[%s4] sm:$0xff]
    %v281 = vld [vmem:[%s4 + $0x8] sm:$0xff]
    %v282 = vld [vmem:[%s4 + $0x10] sm:$0xff]
    %v283 = vld [vmem:[%s4 + $0x18] sm:$0xff]
    %v284 = vmul.f32 %v276, %v280
    %v285 = vmul.f32 %v277, %v281
    %v286 = vmul.f32 %v278, %v282
    %v287 = vmul.f32 %v279, %v283
    %vm288 = vcmask 195584
    %v289 = vsel %vm288, %v284, -inf
    %v290 = vsel %vm288, %v285, -inf
    %v291 = vmax.f32 %v289, %v290
    %v292 = vrot.slane %v291, 4
    %v293 = vmax.f32 %v291, %v292
    %v294 = vrot.slane %v293, 2
    %v295 = vmax.f32 %v293, %v294
    %v296 = vrot.slane %v295, 1
    %v297 = vmax.f32 %v295, %v296
    %v298 = vsel %vm288, %v286, -inf
    %v299 = vsel %vm288, %v287, -inf
    %v300 = vmax.f32 %v298, %v299
    %v301 = vrot.slane %v300, 4
    %v302 = vmax.f32 %v300, %v301
    %v303 = vrot.slane %v302, 2
    %v304 = vmax.f32 %v302, %v303
    %v305 = vrot.slane %v304, 1
    %v306 = vmax.f32 %v304, %v305
    %v307 = vld [vmem:[%s3] sm:$0xff]
    %v308 = vld [vmem:[%s3 + $0x8] sm:$0xff]
    %v309 = vld [vmem:[%s3 + $0x10] sm:$0xff]
    %v310 = vld [vmem:[%s2 + $0x1] sm:$0x1]
    %v311 = vlaneseq
    %v312 = vshrl.u32 %v311, 7
    %v313 = vsub.s32 0, %v312
    %v314 = vrot.slane %v310, %v313
    %vm317 = vcmask 1041409
    %v318 = vsel %vm317, %v306, %v297
    %v319 = vsel %vm288, %v318, 0
    %321 = vmatprep.subr.mxu0 0.0
    %322 = vmatpush1.msra.mxu0 0.0
    %323 = vmatprep.subr.mxu0 0.0
    %324 = vmatpush1.msra.mxu0 0.0
    %325 = vmatprep.subr.mxu0 0.0
    %326 = vmatpush1.msra.mxu0 0.0
    %327 = vmatprep.subr.mxu0 0.0
    %328 = vmatpush1.msra.mxu0 0.0
    %329 = vmatprep.subr.mxu0 0.0
    %330 = vmatpush1.msra.mxu0 0.0
    %331 = vmatprep.subr.mxu0 0.0
    %332 = vmatpush1.msra.mxu0 0.0
    %333 = vmatprep.subr.mxu0 0.0
    %334 = vmatpush1.msra.mxu0 0.0
    %335 = vmatprep.subr.mxu0 0.0
    %336 = vmatpush1.msra.mxu0 0.0
    %337 = vmatprep.subr.mxu0 0.0
    %338 = vmatpush1.msra.mxu0 0.0
    %339 = vmatprep.subr.mxu0 0.0
    %340 = vmatpush1.msra.mxu0 0.0
    %341 = vmatprep.subr.mxu0 0.0
    %342 = vmatpush1.msra.mxu0 0.0
    %343 = vmatprep.subr.mxu0 0.0
    %344 = vmatpush1.msra.mxu0 0.0
    %345 = vmatprep.subr.mxu0 0.0
    %346 = vmatpush1.msra.mxu0 0.0
    %347 = vmatprep.subr.mxu0 0.0
    %348 = vmatpush1.msra.mxu0 %v309
    %349 = vmatprep.subr.mxu0 0.0
    %350 = vmatpush1.msra.mxu0 %v308
    %351 = vmatprep.subr.mxu0 0.0
    %352 = vmatpush1.msra.mxu0 %v307
    %353 = vmatprep.subr.mxu0 0.0
    %354 = vmatpush2.msra.mxu0 0.0
    %355 = vmatprep.subr.mxu0 0.0
    %356 = vmatpush2.msra.mxu0 0.0
    %357 = vmatprep.subr.mxu0 0.0
    %358 = vmatpush2.msra.mxu0 0.0
    %359 = vmatprep.subr.mxu0 0.0
    %360 = vmatpush2.msra.mxu0 0.0
    %361 = vmatprep.subr.mxu0 0.0
    %362 = vmatpush2.msra.mxu0 0.0
    %363 = vmatprep.subr.mxu0 0.0
    %364 = vmatpush2.msra.mxu0 0.0
    %365 = vmatprep.subr.mxu0 0.0
    %366 = vmatpush2.msra.mxu0 0.0
    %367 = vmatprep.subr.mxu0 0.0
    %368 = vmatpush2.msra.mxu0 0.0
    %369 = vmatprep.subr.mxu0 0.0
    %370 = vmatpush2.msra.mxu0 0.0
    %371 = vmatprep.subr.mxu0 0.0
    %372 = vmatpush2.msra.mxu0 0.0
    %373 = vmatprep.subr.mxu0 0.0
    %374 = vmatpush2.msra.mxu0 0.0
    %375 = vmatprep.subr.mxu0 0.0
    %376 = vmatpush2.msra.mxu0 0.0
    %377 = vmatprep.subr.mxu0 0.0
    %378 = vmatpush2.msra.mxu0 0.0
    %379 = vmatprep.subr.mxu0 0.0
    %380 = vmatpush2.msra.mxu0 0.0
    %381 = vmatprep.subr.mxu0 0.0
    %382 = vmatpush2.msra.mxu0 0.0
    %383 = vmatprep.subr.mxu0 0.0
    %384 = vmatpush2.msra.mxu0 0.0
    %385 = vmatprep.mubr.f32.mxu0 0.0
    %386 = vmatmul.mubr.f32.gmra.mxu0 %v319
    %v387 = vpop.f32.mrf.mxu0
    %v388 = vadd.f32 %v314, %v387
    %v389 = vpop.f32.mrf.mxu0
    %390 = vdwg.mxu0
    %vm391 = vcmask 25600
    %392 = vst.msk [vmem:[#allocation2] sm:$0x3] %vm391, %v388
    // Predicated region
    $region22: #{textcnn_forward.1} parent=1 // pred_check
      _
    $region23: #{textcnn_forward.1} parent=1 // pred_check_branch
      %394 = sbr.rel (0) target = $region25
    $region24: #{textcnn_forward.1} parent=1 // pred_region
      %s396 = ssub.s32 32, 32
      %397 = vsyncadd [#allocation3], %s396
      %s399 = sshll.u32 [#allocation2], 4
      %s400 = int_to_ptr.vmem [resolvable:$true] %s399
      %402 = dma.vmem_to_hbm [thread:$0]  %s400, 32, %s5, [#allocation3]
    $region25: #{textcnn_forward.1} parent=1 // pred_fallthru
      _
    // Predicated region
    $region26: #{textcnn_forward.1} parent=1 // pred_check
      _
    $region27: #{textcnn_forward.1} parent=1 // pred_check_branch
      %404 = sbr.rel (0) target = $region29
    $region28: #{textcnn_forward.1} parent=1 // pred_region
      %405 = dma.done [#allocation3], 32
    $region29: #{textcnn_forward.1} parent=1 // pred_fallthru
      _
    %406 = vsyncpa [#allocation3], 1

</llo_original>
